<compile_context>
chip_gen: v6e
topology: v6e:2x2x1
jax: 0.10.0
libtpu: 0.0.40
codegen_flags: <defaults>
</compile_context>

<pallas_src>
import functools
import math

import jax
import jax.numpy as jnp
from jax.experimental import pallas as pl
from jax.experimental.pallas import tpu as pltpu


def _round_up(x, m):
    return (x + m - 1) // m * m


def fcnet_kernel(x_ref, wf_ref, bf_ref, o_ref, *, out_pad):
    """One fused matmul (x @ [W1||W2]) + f32 bias/tanh/sigmoid/gate epilogue."""
    x = x_ref[...]
    # Single MXU pass over the fused weight; f32 accumulation.
    z = jnp.dot(x, wf_ref[...], preferred_element_type=jnp.float32) + bf_ref[...]
    # Lane-aligned split (out_pad is a multiple of 128).
    z1 = z[:, :out_pad]
    z2 = z[:, out_pad:]
    y = jnp.tanh(z1) * jax.nn.sigmoid(z2)
    o_ref[...] = y.astype(o_ref.dtype)


def weight_norm_effective(v, g_scalar):
    """PyTorch weight_norm(dim=None): W = g * V / ||V||_F  (g is a scalar)."""
    norm = jnp.sqrt(jnp.sum(v.astype(jnp.float32) ** 2))
    return (g_scalar * v / norm).astype(v.dtype)


def prepare_fcnet_params(params, *, matmul_dtype=None, lane_pad=128):
    """One-time parameter packing (hoisted out of the per-call forward).

    Builds the effective weight_norm weights, transposes to [in_dim, out_dim],
    lane-pads out_dim to a multiple of 128, and fuses W1||W2 and b1||b2.
    """
    v1, g1, b1, v2, g2, b2 = (
        params["v1"], params["g1"], params["b1"],
        params["v2"], params["g2"], params["b2"],
    )
    w1 = weight_norm_effective(v1, g1).T  # [in_dim, out_dim]
    w2 = weight_norm_effective(v2, g2).T
    in_dim, out_dim = w1.shape
    out_pad = _round_up(out_dim, lane_pad)
    pad = out_pad - out_dim
    if pad:
        w1 = jnp.pad(w1, ((0, 0), (0, pad)))
        w2 = jnp.pad(w2, ((0, 0), (0, pad)))
        b1 = jnp.pad(b1, (0, pad))
        b2 = jnp.pad(b2, (0, pad))
    wf = jnp.concatenate([w1, w2], axis=1)                      # [in_dim, 2*out_pad]
    if matmul_dtype is not None:
        wf = wf.astype(matmul_dtype)
    bf = jnp.concatenate([b1, b2]).reshape(1, -1).astype(jnp.float32)
    return {"wf": wf, "bf": bf, "in_dim": in_dim,
            "out_dim": out_dim, "out_pad": out_pad}


def fcnet_forward(x, packed, *, batch_tile=512):
    """Pallas forward: y = tanh(x@W1+b1) * sigmoid(x@W2+b2), fused matmul."""
    wf, bf = packed["wf"], packed["bf"]
    out_dim, out_pad = packed["out_dim"], packed["out_pad"]
    B, in_dim = x.shape
    assert in_dim == packed["in_dim"], (in_dim, packed["in_dim"])
    out_dtype = x.dtype

    # Match matmul operand dtype (e.g. bf16) chosen at prepare time.
    xm = x if x.dtype == wf.dtype else x.astype(wf.dtype)

    # Large, 8-aligned batch tile; pad batch so every block is full.
    tb = min(batch_tile, _round_up(B, 8))
    tb = _round_up(tb, 8)
    b_pad = _round_up(B, tb)
    if b_pad != B:
        xm = jnp.pad(xm, ((0, b_pad - B), (0, 0)))
    grid = (pl.cdiv(b_pad, tb),)

    out = pl.pallas_call(
        functools.partial(fcnet_kernel, out_pad=out_pad),
        out_shape=jax.ShapeDtypeStruct((b_pad, out_pad), out_dtype),
        grid_spec=pltpu.PrefetchScalarGridSpec(
            num_scalar_prefetch=0,
            grid=grid,
            in_specs=[
                pl.BlockSpec((tb, in_dim), lambda i: (i, 0)),          # x tile
                pl.BlockSpec((in_dim, 2 * out_pad), lambda i: (0, 0)),  # fused W (resident)
                pl.BlockSpec((1, 2 * out_pad), lambda i: (0, 0)),       # fused bias
            ],
            out_specs=pl.BlockSpec((tb, out_pad), lambda i: (i, 0)),
        ),
        compiler_params=pltpu.CompilerParams(
            dimension_semantics=("parallel",),
            vmem_limit_bytes=48 * 1024 * 1024,
        ),
    )(xm, wf, bf)

    if b_pad != B or out_pad != out_dim:
        out = out[:B, :out_dim]
    return out


def init_fcnet_params(key, in_dim, out_dim, dtype=jnp.float32):
    """Deterministic init mimicking nn.Linear defaults + weight_norm(dim=None)."""
    k1, k2, k3, k4 = jax.random.split(key, 4)
    bound_w = 1.0 / math.sqrt(in_dim)
    v1 = jax.random.uniform(k1, (out_dim, in_dim), dtype, -bound_w, bound_w)
    v2 = jax.random.uniform(k2, (out_dim, in_dim), dtype, -bound_w, bound_w)
    b1 = jax.random.uniform(k3, (out_dim,), dtype, -bound_w, bound_w)
    b2 = jax.random.uniform(k4, (out_dim,), dtype, -bound_w, bound_w)
    # weight_norm initializes g = ||V||_F so the effective weight equals V at init.
    g1 = jnp.sqrt(jnp.sum(v1.astype(jnp.float32) ** 2))
    g2 = jnp.sqrt(jnp.sum(v2.astype(jnp.float32) ** 2))
    return {"v1": v1, "g1": g1, "b1": b1, "v2": v2, "g2": g2, "b2": b2}


def fcnet_reference(x, params):
    """Pure-JAX reference for correctness checking."""
    w1 = weight_norm_effective(params["v1"], params["g1"])
    w2 = weight_norm_effective(params["v2"], params["g2"])
    y_hat = jnp.tanh(x @ w1.T + params["b1"])
    g = jax.nn.sigmoid(x @ w2.T + params["b2"])
    return y_hat * g


if __name__ == "__main__":
    key = jax.random.PRNGKey(0)
    k_x, k_p = jax.random.split(key)

    batch, in_dim, out_dim = 8, 32, 32   # dims = [in_dim, out_dim]
    x = jax.random.normal(k_x, (batch, in_dim), dtype=jnp.float32)
    params = init_fcnet_params(k_p, in_dim, out_dim)
    y_ref = fcnet_reference(x, params)

    # f32 matmul path: tight tolerance vs reference.
    packed_f32 = prepare_fcnet_params(params)
    y = jax.block_until_ready(fcnet_forward(x, packed_f32))
    assert y.shape == (batch, out_dim), y.shape
    assert jnp.allclose(y, y_ref, atol=1e-5, rtol=1e-5), "f32 mismatch vs reference"

    # bf16 matmul-operand path (v6e/v7x MXU/bandwidth win): looser tolerance.
    packed_bf16 = prepare_fcnet_params(params, matmul_dtype=jnp.bfloat16)
    y_bf16 = jax.block_until_ready(fcnet_forward(x, packed_bf16))
    assert y_bf16.shape == (batch, out_dim), y_bf16.shape
    assert jnp.allclose(y_bf16, y_ref, atol=3e-2, rtol=3e-2), "bf16 mismatch vs reference"

    print("KERNEL_OK")
</pallas_src>

<mosaic_0001>
module attributes {stable_mosaic.version = 11 : i64} {
  func.func @fcnet_kernel(%arg0: i32, %arg1: memref<8x32xf32, #tpu.memory_space<vmem>>, %arg2: memref<32x256xf32, #tpu.memory_space<vmem>>, %arg3: memref<1x256xf32, #tpu.memory_space<vmem>>, %arg4: memref<8x128xf32, #tpu.memory_space<vmem>>) attributes {dimension_semantics = [#tpu.dimension_semantics<parallel>], iteration_bounds = array<i64: 1>, scalar_prefetch = 0 : i64, scratch_operands = 0 : i64, tpu.core_type = #tpu.core_type<tc>, window_params = [{transform_indices = @transform_0, window_bounds = array<i64: 8, 32>}, {pipeline_mode = #tpu.pipeline_mode<synchronous>, transform_indices = @transform_1, window_bounds = array<i64: 32, 256>}, {pipeline_mode = #tpu.pipeline_mode<synchronous>, transform_indices = @transform_2, window_bounds = array<i64: 1, 256>}, {transform_indices = @transform_3, window_bounds = array<i64: 8, 128>}]} {
    %c0 = arith.constant 0 : index
    %c0_0 = arith.constant 0 : index
    %0 = vector.load %arg1[%c0, %c0_0] : memref<8x32xf32, #tpu.memory_space<vmem>>, vector<8x32xf32>
    %c0_1 = arith.constant 0 : index
    %c0_2 = arith.constant 0 : index
    %1 = vector.load %arg2[%c0_1, %c0_2] : memref<32x256xf32, #tpu.memory_space<vmem>>, vector<32x256xf32>
    %cst = arith.constant dense<0.000000e+00> : vector<8x256xf32>
    %2 = tpu.matmul %0, %1, %cst {dimension_numbers = #tpu.dot_dimension_numbers<[1], [0], [0], [1], [0, 0, 1, 1], [], []>} : vector<8x32xf32>, vector<32x256xf32>, vector<8x256xf32> -> vector<8x256xf32>
    %c0_3 = arith.constant 0 : index
    %c0_4 = arith.constant 0 : index
    %3 = vector.load %arg3[%c0_3, %c0_4] : memref<1x256xf32, #tpu.memory_space<vmem>>, vector<1x256xf32>
    %4 = vector.broadcast %3 : vector<1x256xf32> to vector<8x256xf32>
    %5 = arith.addf %2, %4 : vector<8x256xf32>
    %6 = vector.extract_strided_slice %5 {offsets = [0, 0], sizes = [8, 128], strides = [1, 1]} : vector<8x256xf32> to vector<8x128xf32>
    %7 = vector.extract_strided_slice %5 {offsets = [0, 128], sizes = [8, 128], strides = [1, 1]} : vector<8x256xf32> to vector<8x128xf32>
    %8 = math.tanh %6 : vector<8x128xf32>
    %9 = arith.negf %7 : vector<8x128xf32>
    %10 = math.exp %9 : vector<8x128xf32>
    %cst_5 = arith.constant 1.000000e+00 : f32
    %11 = vector.broadcast %cst_5 : f32 to vector<8x128xf32>
    %12 = arith.addf %11, %10 : vector<8x128xf32>
    %13 = arith.divf %11, %12 : vector<8x128xf32>
    %14 = arith.mulf %8, %13 : vector<8x128xf32>
    %c0_6 = arith.constant 0 : index
    %c0_7 = arith.constant 0 : index
    %15 = vector.load %arg4[%c0_6, %c0_7] : memref<8x128xf32, #tpu.memory_space<vmem>>, vector<8x128xf32>
    tpu.vector_store %arg4[%c0_6, %c0_7], %14 {strides = array<i32>} : memref<8x128xf32, #tpu.memory_space<vmem>>, vector<8x128xf32>,
    return
  }
  func.func @transform_0(%arg0: i32) -> (i32, i32) {
    %c0_i32 = arith.constant 0 : i32
    %c0_i32_0 = arith.constant 0 : i32
    return %arg0, %c0_i32 : i32, i32
  }
  func.func @transform_1(%arg0: i32) -> (i32, i32) {
    %c0_i32 = arith.constant 0 : i32
    %c0_i32_0 = arith.constant 0 : i32
    %c0_i32_1 = arith.constant 0 : i32
    return %c0_i32, %c0_i32_0 : i32, i32
  }
  func.func @transform_2(%arg0: i32) -> (i32, i32) {
    %c0_i32 = arith.constant 0 : i32
    %c0_i32_0 = arith.constant 0 : i32
    %c0_i32_1 = arith.constant 0 : i32
    return %c0_i32, %c0_i32_0 : i32, i32
  }
  func.func @transform_3(%arg0: i32) -> (i32, i32) {
    %c0_i32 = arith.constant 0 : i32
    %c0_i32_0 = arith.constant 0 : i32
    return %arg0, %c0_i32 : i32, i32
  }
}

</mosaic_0001>

<llo_original>
// kernel: tpu_custom_call.1
$region0: #{tpu_custom_call.1}
  #allocation0 [shape = 'u32[]', space=smem, size = 0x4, offset = 0x4, fixed_abs, tag = 'smem constant byte address 0x4 - core index']
  #allocation1 [shape = 'u32[144,128]{1,0:T(1,128)}', space=vmem, size = 0x12000, scoped, tag = 'internal scratch']
  %s0 = inlined_call_operand.hbm [shape: f32[8,32], index: 0, kind: input, shape index: {}]
  %s1 = inlined_call_operand.hbm [shape: f32[32,256], index: 1, kind: input, shape index: {}]
  %s2 = inlined_call_operand.vmem [shape: f32[1,256], index: 2, kind: input, shape index: {}]
  %s3 = inlined_call_operand.hbm [shape: f32[8,128], index: 3, kind: output, shape index: {}]
  %s4 = sld [smem:[#allocation0]]
  $region30: #{tpu_custom_call.1} parent=0
    _
  %s6 = ssub.s32 1, %s4
  %s7 = scalar_select 0, %s6, %s4
  $region1: #{tpu_custom_call.1} parent=0
    #allocation2 [shape = 'u8[4096]{0}', space=vmem, size = 0x1000, scoped, tag = 'input window, operand 0, single buffered']
    #allocation3 [shape = 's32[1]{0}', space=sflag, size = 0x4, scoped, tag = 'scoped memory for tpu_custom_call.1']
    #allocation4 [shape = 's32[1]{0}', space=sflag, size = 0x4, scoped, tag = 'scoped memory for tpu_custom_call.1']
    #allocation5 [shape = 'u8[32768]{0}', space=vmem, size = 0x8000, scoped, tag = 'input window, operand 1, single buffered']
    #allocation6 [shape = 's32[1]{0}', space=sflag, size = 0x4, scoped, tag = 'scoped memory for tpu_custom_call.1']
    #allocation7 [shape = 'u8[4096]{0}', space=vmem, size = 0x1000, scoped, tag = 'output window, operand 0, single buffered']
    %8 = vsyncpa [#allocation3], 0
    %9 = vsyncpa [#allocation6], 0
    %10 = vsyncpa [#allocation4], 0
    // Predicated region
    $region2: #{tpu_custom_call.1} parent=1 // pred_check
      _
    $region3: #{tpu_custom_call.1} parent=1 // pred_check_branch
      %12 = sbr.rel (0) target = $region5
    $region4: #{tpu_custom_call.1} parent=1 // pred_region
      %s14 = ssub.s32 128, 128
      %15 = vsyncadd [#allocation3], %s14
      %s17 = sshll.u32 [#allocation2], 4
      %s18 = int_to_ptr.vmem [resolvable:$true] %s17
      %20 = dma.hbm_to_vmem [thread:$0]  %s0, 128, %s18, [#allocation3]
    $region5: #{tpu_custom_call.1} parent=1 // pred_fallthru
      _
    // Predicated region
    $region6: #{tpu_custom_call.1} parent=1 // pred_check
      _
    $region7: #{tpu_custom_call.1} parent=1 // pred_check_branch
      %22 = sbr.rel (0) target = $region9
    $region8: #{tpu_custom_call.1} parent=1 // pred_region
      %s24 = ssub.s32 1024, 1024
      %25 = vsyncadd [#allocation6], %s24
      %s26 = sshll.u32 [#allocation5], 4
      %s27 = int_to_ptr.vmem [resolvable:$true] %s26
      %32 = dma.hbm_to_vmem [thread:$0]  %s1, 1024, %s27, [#allocation6], 256, 256, 16
    $region9: #{tpu_custom_call.1} parent=1 // pred_fallthru
      _
    // Predicated region
    $region10: #{tpu_custom_call.1} parent=1 // pred_check
      _
    $region11: #{tpu_custom_call.1} parent=1 // pred_check_branch
      %34 = sbr.rel (0) target = $region13
    $region12: #{tpu_custom_call.1} parent=1 // pred_region
      _
    $region13: #{tpu_custom_call.1} parent=1 // pred_fallthru
      _
    // Predicated region
    $region14: #{tpu_custom_call.1} parent=1 // pred_check
      _
    $region15: #{tpu_custom_call.1} parent=1 // pred_check_branch
      %36 = sbr.rel (0) target = $region17
    $region16: #{tpu_custom_call.1} parent=1 // pred_region
      %37 = dma.done [#allocation3], 128
    $region17: #{tpu_custom_call.1} parent=1 // pred_fallthru
      _
    // Predicated region
    $region18: #{tpu_custom_call.1} parent=1 // pred_check
      _
    $region19: #{tpu_custom_call.1} parent=1 // pred_check_branch
      %39 = sbr.rel (0) target = $region21
    $region20: #{tpu_custom_call.1} parent=1 // pred_region
      %40 = dma.done [#allocation6], 1024
    $region21: #{tpu_custom_call.1} parent=1 // pred_fallthru
      _
    %v41 = vld [vmem:[#allocation2] sm:$0xff]
    %v42 = vld [vmem:[#allocation5] sm:$0xff]
    %v43 = vld [vmem:[#allocation5 + $0x8] sm:$0xff]
    %v44 = vld [vmem:[#allocation5 + $0x10] sm:$0xff]
    %v45 = vld [vmem:[#allocation5 + $0x18] sm:$0xff]
    %v46 = vld [vmem:[#allocation5 + $0x20] sm:$0xff]
    %v47 = vld [vmem:[#allocation5 + $0x28] sm:$0xff]
    %v48 = vld [vmem:[#allocation5 + $0x30] sm:$0xff]
    %v49 = vld [vmem:[#allocation5 + $0x38] sm:$0xff]
    %v50 = vld [vmem:[%s2] sm:$0x3]
    %v52 = vlaneseq
    %v53 = vshrl.u32 %v52, 7
    %v54 = vsub.s32 0, %v53
    %v55 = vrot.slane %v50, %v54
    %v56 = vlaneseq
    %v57 = vshrl.u32 %v56, 7
    %v58 = vsub.s32 1, %v57
    %v59 = vrot.slane %v50, %v58
    %vm62 = vcmask 261120
    %v64 = vsel %vm62, %v41, 0
    %66 = vmatprep.subr.mxu0 0.0
    %67 = vmatpush1.msra.mxu0 0.0
    %68 = vmatprep.subr.mxu0 0.0
    %69 = vmatpush1.msra.mxu0 0.0
    %70 = vmatprep.subr.mxu0 0.0
    %71 = vmatpush1.msra.mxu0 0.0
    %72 = vmatprep.subr.mxu0 0.0
    %73 = vmatpush1.msra.mxu0 0.0
    %74 = vmatprep.subr.mxu0 0.0
    %75 = vmatpush1.msra.mxu0 0.0
    %76 = vmatprep.subr.mxu0 0.0
    %77 = vmatpush1.msra.mxu0 0.0
    %78 = vmatprep.subr.mxu0 0.0
    %79 = vmatpush1.msra.mxu0 0.0
    %80 = vmatprep.subr.mxu0 0.0
    %81 = vmatpush1.msra.mxu0 0.0
    %82 = vmatprep.subr.mxu0 0.0
    %83 = vmatpush1.msra.mxu0 0.0
    %84 = vmatprep.subr.mxu0 0.0
    %85 = vmatpush1.msra.mxu0 0.0
    %86 = vmatprep.subr.mxu0 0.0
    %87 = vmatpush1.msra.mxu0 0.0
    %88 = vmatprep.subr.mxu0 0.0
    %89 = vmatpush1.msra.mxu0 0.0
    %90 = vmatprep.subr.mxu0 %v49
    %91 = vmatpush1.msra.mxu0 %v48
    %92 = vmatprep.subr.mxu0 %v47
    %93 = vmatpush1.msra.mxu0 %v46
    %94 = vmatprep.subr.mxu0 %v45
    %95 = vmatpush1.msra.mxu0 %v44
    %96 = vmatprep.subr.mxu0 %v43
    %97 = vmatpush1.msra.mxu0 %v42
    %98 = vmatprep.subr.mxu0 0.0
    %99 = vmatpush2.msra.mxu0 0.0
    %100 = vmatprep.subr.mxu0 0.0
    %101 = vmatpush2.msra.mxu0 0.0
    %102 = vmatprep.subr.mxu0 0.0
    %103 = vmatpush2.msra.mxu0 0.0
    %104 = vmatprep.subr.mxu0 0.0
    %105 = vmatpush2.msra.mxu0 0.0
    %106 = vmatprep.subr.mxu0 0.0
    %107 = vmatpush2.msra.mxu0 0.0
    %108 = vmatprep.subr.mxu0 0.0
    %109 = vmatpush2.msra.mxu0 0.0
    %110 = vmatprep.subr.mxu0 0.0
    %111 = vmatpush2.msra.mxu0 0.0
    %112 = vmatprep.subr.mxu0 0.0
    %113 = vmatpush2.msra.mxu0 0.0
    %114 = vmatprep.subr.mxu0 0.0
    %115 = vmatpush2.msra.mxu0 0.0
    %116 = vmatprep.subr.mxu0 0.0
    %117 = vmatpush2.msra.mxu0 0.0
    %118 = vmatprep.subr.mxu0 0.0
    %119 = vmatpush2.msra.mxu0 0.0
    %120 = vmatprep.subr.mxu0 0.0
    %121 = vmatpush2.msra.mxu0 0.0
    %122 = vmatprep.subr.mxu0 0.0
    %123 = vmatpush2.msra.mxu0 0.0
    %124 = vmatprep.subr.mxu0 0.0
    %125 = vmatpush2.msra.mxu0 0.0
    %126 = vmatprep.subr.mxu0 0.0
    %127 = vmatpush2.msra.mxu0 0.0
    %128 = vmatprep.subr.mxu0 0.0
    %129 = vmatpush2.msra.mxu0 0.0
    %130 = vmatprep.mubr.f32.mxu0 0.0
    %131 = vmatmul.mubr.f32.gmra.mxu0 %v64
    %v132 = vpop.f32.mrf.mxu0
    %v133 = vadd.f32 %v55, %v132
    %v134 = vpop.f32.mrf.mxu0
    %v135 = vadd.f32 %v59, %v134
    %136 = vdwg.mxu0
    %v137 = vtanh.pop %v133
    %v138 = vxor.u32 %v135, 2147483648
    %v139 = vmul.f32 %v138, 1.442695
    %v140 = vpow.pop %v139
    %v141 = vadd.f32 %v140, 1.0
    %v142 = vrcp.pop %v141
    %v143 = vmul.f32 1.0, %v142
    %v144 = vmul.f32 %v137, %v143
    %145 = vst [vmem:[#allocation7] sm:$0xff] %v144
    // Predicated region
    $region22: #{tpu_custom_call.1} parent=1 // pred_check
      _
    $region23: #{tpu_custom_call.1} parent=1 // pred_check_branch
      %147 = sbr.rel (0) target = $region25
    $region24: #{tpu_custom_call.1} parent=1 // pred_region
      %s149 = ssub.s32 128, 128
      %150 = vsyncadd [#allocation4], %s149
      %s152 = sshll.u32 [#allocation7], 4
      %s153 = int_to_ptr.vmem [resolvable:$true] %s152
      %155 = dma.vmem_to_hbm [thread:$0]  %s153, 128, %s3, [#allocation4]
    $region25: #{tpu_custom_call.1} parent=1 // pred_fallthru
      _
    // Predicated region
    $region26: #{tpu_custom_call.1} parent=1 // pred_check
      _
    $region27: #{tpu_custom_call.1} parent=1 // pred_check_branch
      %157 = sbr.rel (0) target = $region29
    $region28: #{tpu_custom_call.1} parent=1 // pred_region
      %158 = dma.done [#allocation4], 128
    $region29: #{tpu_custom_call.1} parent=1 // pred_fallthru
      _
    %159 = vsyncpa [#allocation3], 1
    %160 = vsyncpa [#allocation6], 1
    %161 = vsyncpa [#allocation4], 1

</llo_original>
